<compile_context>
chip_gen: v5e
topology: v5e:2x2
jax: 0.10.0
libtpu: 0.0.40
codegen_flags: <defaults>
</compile_context>

<pallas_src>
import functools

import jax
import jax.numpy as jnp
from jax.experimental import pallas as pl
from jax.experimental.pallas import tpu as pltpu

N_PAD = 128  # lane-dense padded width of the final layer output


def mlp_kernel(x_ref, w1_ref, b1_ref, w2_ref, b2_ref, w3_ref, b3_ref, o_ref):
    # x_ref: (TB, 22) f32 (cast to bf16 here — folds the cast into the kernel)
    # w1: (22, 128) bf16   w2: (128, 256) bf16
    # w3: (256, 128) bf16 (zero-padded from 4 cols)   biases: f32
    x = x_ref[...].astype(jnp.bfloat16)

    h1 = jnp.dot(x, w1_ref[...], preferred_element_type=jnp.float32)
    h1 = jnp.maximum(h1 + b1_ref[...], 0.0)            # bias + ReLU in f32
    h1 = h1.astype(jnp.bfloat16)

    h2 = jnp.dot(h1, w2_ref[...], preferred_element_type=jnp.float32)
    h2 = jnp.maximum(h2 + b2_ref[...], 0.0)
    h2 = h2.astype(jnp.bfloat16)

    out = jnp.dot(h2, w3_ref[...], preferred_element_type=jnp.float32)
    o_ref[...] = (out + b3_ref[...]).astype(o_ref.dtype)   # bf16 store


def _round_up(n, m):
    return -(-n // m) * m


def prepare_params(params, num_classes=None):
    """One-time prep: bf16 weight casts + zero-padding of the final layer."""
    w1, b1, w2, b2, w3, b3 = params
    if num_classes is None:
        num_classes = w3.shape[1]
    w3p = jnp.zeros((w3.shape[0], N_PAD), w3.dtype).at[:, :num_classes].set(w3)
    b3p = jnp.zeros((1, N_PAD), b3.dtype).at[:, :num_classes].set(b3)
    prepared = (
        w1.astype(jnp.bfloat16), b1.astype(jnp.float32),
        w2.astype(jnp.bfloat16), b2.astype(jnp.float32),
        w3p.astype(jnp.bfloat16), b3p.astype(jnp.float32),
    )
    return prepared, num_classes


@functools.partial(jax.jit, static_argnames=("num_classes", "tile_b"))
def network_forward(x, prepared, num_classes=4, tile_b=2048):
    """x: (B, input_size) f32.  Returns (B, num_classes) f32."""
    w1b, b1, w2b, b2, w3b, b3p = prepared
    B, F = x.shape

    # Batch tile: multiple of 8 sublanes; aim for >= 2 tiles (v7x megacore)
    # while capping at tile_b (stays inside v5e's 16 MiB scoped VMEM).
    TB = min(tile_b, max(8, _round_up(pl.cdiv(B, 2), 8)))
    grid = (pl.cdiv(B, TB),)

    out = pl.pallas_call(
        mlp_kernel,
        out_shape=jax.ShapeDtypeStruct((B, N_PAD), jnp.bfloat16),
        grid=grid,
        in_specs=[
            pl.BlockSpec((TB, F), lambda i: (i, 0)),        # x: streamed per tile
            pl.BlockSpec(w1b.shape, lambda i: (0, 0)),      # weights: VMEM-resident
            pl.BlockSpec(b1.shape, lambda i: (0, 0)),
            pl.BlockSpec(w2b.shape, lambda i: (0, 0)),
            pl.BlockSpec(b2.shape, lambda i: (0, 0)),
            pl.BlockSpec(w3b.shape, lambda i: (0, 0)),
            pl.BlockSpec(b3p.shape, lambda i: (0, 0)),
        ],
        out_specs=pl.BlockSpec((TB, N_PAD), lambda i: (i, 0)),
        compiler_params=pltpu.CompilerParams(
            dimension_semantics=("parallel",),              # megacore on v7x
        ),
    )(x, w1b, b1, w2b, b2, w3b, b3p)

    return out[:, :num_classes].astype(jnp.float32)


def init_params(key, input_size=22, hidden_size=128, num_classes=4):
    # Deterministic init mimicking nn.Linear's U(-1/sqrt(fan_in), 1/sqrt(fan_in)).
    dims = [(input_size, hidden_size),
            (hidden_size, hidden_size * 2),
            (hidden_size * 2, num_classes)]
    params = []
    for (fan_in, fan_out) in dims:
        key, kw, kb = jax.random.split(key, 3)
        bound = 1.0 / (fan_in ** 0.5)
        w = jax.random.uniform(kw, (fan_in, fan_out), jnp.float32, -bound, bound)
        b = jax.random.uniform(kb, (1, fan_out), jnp.float32, -bound, bound)
        params += [w, b]
    return tuple(params)


def reference_forward_bf16(x, params):
    # Same math as the kernel: bf16 matmul operands, f32 accumulation/bias/ReLU.
    w1, b1, w2, b2, w3, b3 = params
    h = jnp.dot(x.astype(jnp.bfloat16), w1.astype(jnp.bfloat16),
                preferred_element_type=jnp.float32) + b1
    h = jnp.maximum(h, 0.0).astype(jnp.bfloat16)
    h = jnp.dot(h, w2.astype(jnp.bfloat16),
                preferred_element_type=jnp.float32) + b2
    h = jnp.maximum(h, 0.0).astype(jnp.bfloat16)
    return jnp.dot(h, w3.astype(jnp.bfloat16),
                   preferred_element_type=jnp.float32) + b3


if __name__ == "__main__":
    key = jax.random.PRNGKey(0)
    key, kx = jax.random.split(key)
    batch, input_size, hidden_size, num_classes = 8, 22, 128, 4

    x = jax.random.normal(kx, (batch, input_size), jnp.float32)
    params = init_params(key, input_size, hidden_size, num_classes)
    prepared, nc = prepare_params(params, num_classes)

    out = network_forward(x, prepared, num_classes=nc)
    out = jax.block_until_ready(out)

    ref = reference_forward_bf16(x, params)
    assert out.shape == (batch, num_classes)
    assert jnp.allclose(out, ref, atol=2e-2, rtol=2e-2)
    print("KERNEL_OK")
</pallas_src>

<mosaic_0001>
module attributes {stable_mosaic.version = 11 : i64} {
  func.func @mlp_kernel(%arg0: i32, %arg1: memref<8x22xf32, #tpu.memory_space<vmem>>, %arg2: memref<22x128xbf16, #tpu.memory_space<vmem>>, %arg3: memref<1x128xf32, #tpu.memory_space<vmem>>, %arg4: memref<128x256xbf16, #tpu.memory_space<vmem>>, %arg5: memref<1x256xf32, #tpu.memory_space<vmem>>, %arg6: memref<256x128xbf16, #tpu.memory_space<vmem>>, %arg7: memref<1x128xf32, #tpu.memory_space<vmem>>, %arg8: memref<8x128xbf16, #tpu.memory_space<vmem>>) attributes {dimension_semantics = [#tpu.dimension_semantics<parallel>], iteration_bounds = array<i64: 1>, scalar_prefetch = 0 : i64, scratch_operands = 0 : i64, tpu.core_type = #tpu.core_type<tc>, window_params = [{transform_indices = @transform_0, window_bounds = array<i64: 8, 22>}, {pipeline_mode = #tpu.pipeline_mode<synchronous>, transform_indices = @transform_1, window_bounds = array<i64: 22, 128>}, {pipeline_mode = #tpu.pipeline_mode<synchronous>, transform_indices = @transform_2, window_bounds = array<i64: 1, 128>}, {pipeline_mode = #tpu.pipeline_mode<synchronous>, transform_indices = @transform_3, window_bounds = array<i64: 128, 256>}, {pipeline_mode = #tpu.pipeline_mode<synchronous>, transform_indices = @transform_4, window_bounds = array<i64: 1, 256>}, {pipeline_mode = #tpu.pipeline_mode<synchronous>, transform_indices = @transform_5, window_bounds = array<i64: 256, 128>}, {pipeline_mode = #tpu.pipeline_mode<synchronous>, transform_indices = @transform_6, window_bounds = array<i64: 1, 128>}, {transform_indices = @transform_7, window_bounds = array<i64: 8, 128>}]} {
    %c0 = arith.constant 0 : index
    %c0_0 = arith.constant 0 : index
    %0 = vector.load %arg1[%c0, %c0_0] : memref<8x22xf32, #tpu.memory_space<vmem>>, vector<8x22xf32>
    %1 = arith.truncf %0 : vector<8x22xf32> to vector<8x22xbf16>
    %c0_1 = arith.constant 0 : index
    %c0_2 = arith.constant 0 : index
    %2 = vector.load %arg2[%c0_1, %c0_2] : memref<22x128xbf16, #tpu.memory_space<vmem>>, vector<22x128xbf16>
    %cst = arith.constant dense<0.000000e+00> : vector<8x128xf32>
    %3 = tpu.matmul %1, %2, %cst {dimension_numbers = #tpu.dot_dimension_numbers<[1], [0], [0], [1], [0, 0, 1, 1], [], []>} : vector<8x22xbf16>, vector<22x128xbf16>, vector<8x128xf32> -> vector<8x128xf32>
    %c0_3 = arith.constant 0 : index
    %c0_4 = arith.constant 0 : index
    %4 = vector.load %arg3[%c0_3, %c0_4] : memref<1x128xf32, #tpu.memory_space<vmem>>, vector<1x128xf32>
    %5 = vector.broadcast %4 : vector<1x128xf32> to vector<8x128xf32>
    %6 = arith.addf %3, %5 : vector<8x128xf32>
    %cst_5 = arith.constant 0.000000e+00 : f32
    %7 = vector.broadcast %cst_5 : f32 to vector<8x128xf32>
    %8 = arith.maximumf %6, %7 : vector<8x128xf32>
    %9 = arith.truncf %8 : vector<8x128xf32> to vector<8x128xbf16>
    %c0_6 = arith.constant 0 : index
    %c0_7 = arith.constant 0 : index
    %10 = vector.load %arg4[%c0_6, %c0_7] : memref<128x256xbf16, #tpu.memory_space<vmem>>, vector<128x256xbf16>
    %cst_8 = arith.constant dense<0.000000e+00> : vector<8x256xf32>
    %11 = tpu.matmul %9, %10, %cst_8 {dimension_numbers = #tpu.dot_dimension_numbers<[1], [0], [0], [1], [0, 0, 1, 1], [], []>} : vector<8x128xbf16>, vector<128x256xbf16>, vector<8x256xf32> -> vector<8x256xf32>
    %c0_9 = arith.constant 0 : index
    %c0_10 = arith.constant 0 : index
    %12 = vector.load %arg5[%c0_9, %c0_10] : memref<1x256xf32, #tpu.memory_space<vmem>>, vector<1x256xf32>
    %13 = vector.broadcast %12 : vector<1x256xf32> to vector<8x256xf32>
    %14 = arith.addf %11, %13 : vector<8x256xf32>
    %cst_11 = arith.constant 0.000000e+00 : f32
    %15 = vector.broadcast %cst_11 : f32 to vector<8x256xf32>
    %16 = arith.maximumf %14, %15 : vector<8x256xf32>
    %17 = arith.truncf %16 : vector<8x256xf32> to vector<8x256xbf16>
    %c0_12 = arith.constant 0 : index
    %c0_13 = arith.constant 0 : index
    %18 = vector.load %arg6[%c0_12, %c0_13] : memref<256x128xbf16, #tpu.memory_space<vmem>>, vector<256x128xbf16>
    %cst_14 = arith.constant dense<0.000000e+00> : vector<8x128xf32>
    %19 = tpu.matmul %17, %18, %cst_14 {dimension_numbers = #tpu.dot_dimension_numbers<[1], [0], [0], [1], [0, 0, 1, 1], [], []>} : vector<8x256xbf16>, vector<256x128xbf16>, vector<8x128xf32> -> vector<8x128xf32>
    %c0_15 = arith.constant 0 : index
    %c0_16 = arith.constant 0 : index
    %20 = vector.load %arg7[%c0_15, %c0_16] : memref<1x128xf32, #tpu.memory_space<vmem>>, vector<1x128xf32>
    %21 = vector.broadcast %20 : vector<1x128xf32> to vector<8x128xf32>
    %22 = arith.addf %19, %21 : vector<8x128xf32>
    %23 = arith.truncf %22 : vector<8x128xf32> to vector<8x128xbf16>
    %c0_17 = arith.constant 0 : index
    %c0_18 = arith.constant 0 : index
    %24 = vector.load %arg8[%c0_17, %c0_18] : memref<8x128xbf16, #tpu.memory_space<vmem>>, vector<8x128xbf16>
    tpu.vector_store %arg8[%c0_17, %c0_18], %23 {strides = array<i32>} : memref<8x128xbf16, #tpu.memory_space<vmem>>, vector<8x128xbf16>,
    return
  }
  func.func @transform_0(%arg0: i32) -> (i32, i32) {
    %c0_i32 = arith.constant 0 : i32
    %c0_i32_0 = arith.constant 0 : i32
    return %arg0, %c0_i32 : i32, i32
  }
  func.func @transform_1(%arg0: i32) -> (i32, i32) {
    %c0_i32 = arith.constant 0 : i32
    %c0_i32_0 = arith.constant 0 : i32
    %c0_i32_1 = arith.constant 0 : i32
    return %c0_i32, %c0_i32_0 : i32, i32
  }
  func.func @transform_2(%arg0: i32) -> (i32, i32) {
    %c0_i32 = arith.constant 0 : i32
    %c0_i32_0 = arith.constant 0 : i32
    %c0_i32_1 = arith.constant 0 : i32
    return %c0_i32, %c0_i32_0 : i32, i32
  }
  func.func @transform_3(%arg0: i32) -> (i32, i32) {
    %c0_i32 = arith.constant 0 : i32
    %c0_i32_0 = arith.constant 0 : i32
    %c0_i32_1 = arith.constant 0 : i32
    return %c0_i32, %c0_i32_0 : i32, i32
  }
  func.func @transform_4(%arg0: i32) -> (i32, i32) {
    %c0_i32 = arith.constant 0 : i32
    %c0_i32_0 = arith.constant 0 : i32
    %c0_i32_1 = arith.constant 0 : i32
    return %c0_i32, %c0_i32_0 : i32, i32
  }
  func.func @transform_5(%arg0: i32) -> (i32, i32) {
    %c0_i32 = arith.constant 0 : i32
    %c0_i32_0 = arith.constant 0 : i32
    %c0_i32_1 = arith.constant 0 : i32
    return %c0_i32, %c0_i32_0 : i32, i32
  }
  func.func @transform_6(%arg0: i32) -> (i32, i32) {
    %c0_i32 = arith.constant 0 : i32
    %c0_i32_0 = arith.constant 0 : i32
    %c0_i32_1 = arith.constant 0 : i32
    return %c0_i32, %c0_i32_0 : i32, i32
  }
  func.func @transform_7(%arg0: i32) -> (i32, i32) {
    %c0_i32 = arith.constant 0 : i32
    %c0_i32_0 = arith.constant 0 : i32
    return %arg0, %c0_i32 : i32, i32
  }
}

</mosaic_0001>

<llo_original>
// kernel: network_forward.1
$region0: #{network_forward.1}
  #allocation0 [shape = 'u32[]', space=smem, size = 0x4, offset = 0x4, fixed_abs, tag = 'smem constant byte address 0x4 - core index']
  #allocation1 [shape = 'u32[72,128]{1,0:T(1,128)}', space=vmem, size = 0x9000, scoped, tag = 'internal scratch']
  %s0 = inlined_call_operand.hbm [shape: f32[8,22], index: 0, kind: input, shape index: {}]
  %s1 = inlined_call_operand.hbm [shape: bf16[22,128], index: 1, kind: input, shape index: {}]
  %s2 = inlined_call_operand.vmem [shape: f32[1,128], index: 2, kind: input, shape index: {}]
  %s3 = inlined_call_operand.hbm [shape: bf16[128,256], index: 3, kind: input, shape index: {}]
  %s4 = inlined_call_operand.vmem [shape: f32[1,256], index: 4, kind: input, shape index: {}]
  %s5 = inlined_call_operand.hbm [shape: bf16[256,128], index: 5, kind: input, shape index: {}]
  %s6 = inlined_call_operand.vmem [shape: f32[1,128], index: 6, kind: input, shape index: {}]
  %s7 = inlined_call_operand.vmem [shape: bf16[8,128], index: 7, kind: output, shape index: {}]
  %s8 = sld [smem:[#allocation0]]
  $region54: #{network_forward.1} parent=0
    _
  %s10 = ssub.s32 1, %s8
  %s11 = scalar_select 0, %s10, %s8
  $region1: #{network_forward.1} parent=0
    #allocation2 [shape = 'u8[4096]{0}', space=vmem, size = 0x1000, scoped, tag = 'input window, operand 0, single buffered']
    #allocation3 [shape = 's32[1]{0}', space=sflag, size = 0x4, scoped, tag = 'scoped memory for network_forward.1']
    #allocation4 [shape = 'u8[6144]{0}', space=vmem, size = 0x1800, scoped, tag = 'input window, operand 1, single buffered']
    #allocation5 [shape = 's32[1]{0}', space=sflag, size = 0x4, scoped, tag = 'scoped memory for network_forward.1']
    #allocation6 [shape = 'u8[65536]{0}', space=vmem, size = 0x10000, scoped, tag = 'input window, operand 3, single buffered']
    #allocation7 [shape = 'u8[65536]{0}', space=vmem, size = 0x10000, scoped, tag = 'input window, operand 5, single buffered']
    #allocation8 [shape = 's32[1]{0}', space=sflag, size = 0x4, scoped, tag = 'scoped memory for network_forward.1']
    %12 = vsyncpa [#allocation3], 0
    %13 = vsyncpa [#allocation5], 0
    %14 = vsyncpa [#allocation8], 0
    // Predicated region
    $region2: #{network_forward.1} parent=1 // pred_check
      _
    $region3: #{network_forward.1} parent=1 // pred_check_branch
      %16 = sbr.rel (0) target = $region5
    $region4: #{network_forward.1} parent=1 // pred_region
      %18 = vsyncadd [#allocation3], 0
      %s20 = sshll.u32 %s0, 4
      %s21 = int_to_ptr.hbm [resolvable:$true] %s20
      %s22 = sshll.u32 [#allocation2], 4
      %s23 = int_to_ptr.vmem [resolvable:$true] %s22
      %25 = dma.hbm_to_vmem [thread:$0]  %s21, 128, %s23, [#allocation3]
    $region5: #{network_forward.1} parent=1 // pred_fallthru
      _
    // Predicated region
    $region6: #{network_forward.1} parent=1 // pred_check
      _
    $region7: #{network_forward.1} parent=1 // pred_check_branch
      %27 = sbr.rel (0) target = $region9
    $region8: #{network_forward.1} parent=1 // pred_region
      %29 = vsyncadd [#allocation5], 0
      %s30 = sshll.u32 %s1, 4
      %s31 = int_to_ptr.hbm [resolvable:$true] %s30
      %s32 = sshll.u32 [#allocation4], 4
      %s33 = int_to_ptr.vmem [resolvable:$true] %s32
      %38 = dma.hbm_to_vmem [thread:$0]  %s31, 192, %s33, [#allocation5], 64, 64, 4
    $region9: #{network_forward.1} parent=1 // pred_fallthru
      _
    // Predicated region
    $region10: #{network_forward.1} parent=1 // pred_check
      _
    $region11: #{network_forward.1} parent=1 // pred_check_branch
      %40 = sbr.rel (0) target = $region13
    $region12: #{network_forward.1} parent=1 // pred_region
      _
    $region13: #{network_forward.1} parent=1 // pred_fallthru
      _
    // Predicated region
    $region14: #{network_forward.1} parent=1 // pred_check
      _
    $region15: #{network_forward.1} parent=1 // pred_check_branch
      %42 = sbr.rel (0) target = $region17
    $region16: #{network_forward.1} parent=1 // pred_region
      %44 = vsyncadd [#allocation5], 0
      %s45 = sshll.u32 %s3, 4
      %s46 = int_to_ptr.hbm [resolvable:$true] %s45
      %s47 = sshll.u32 [#allocation6], 4
      %s48 = int_to_ptr.vmem [resolvable:$true] %s47
      %53 = dma.hbm_to_vmem [thread:$0]  %s46, 2048, %s48, [#allocation5], 128, 128, 8
    $region17: #{network_forward.1} parent=1 // pred_fallthru
      _
    // Predicated region
    $region18: #{network_forward.1} parent=1 // pred_check
      _
    $region19: #{network_forward.1} parent=1 // pred_check_branch
      %55 = sbr.rel (0) target = $region21
    $region20: #{network_forward.1} parent=1 // pred_region
      _
    $region21: #{network_forward.1} parent=1 // pred_fallthru
      _
    // Predicated region
    $region22: #{network_forward.1} parent=1 // pred_check
      _
    $region23: #{network_forward.1} parent=1 // pred_check_branch
      %57 = sbr.rel (0) target = $region25
    $region24: #{network_forward.1} parent=1 // pred_region
      %59 = vsyncadd [#allocation8], 0
      %s60 = sshll.u32 %s5, 4
      %s61 = int_to_ptr.hbm [resolvable:$true] %s60
      %s62 = sshll.u32 [#allocation7], 4
      %s63 = int_to_ptr.vmem [resolvable:$true] %s62
      %68 = dma.hbm_to_vmem [thread:$0]  %s61, 2048, %s63, [#allocation8], 64, 64, 4
    $region25: #{network_forward.1} parent=1 // pred_fallthru
      _
    // Predicated region
    $region26: #{network_forward.1} parent=1 // pred_check
      _
    $region27: #{network_forward.1} parent=1 // pred_check_branch
      %70 = sbr.rel (0) target = $region29
    $region28: #{network_forward.1} parent=1 // pred_region
      _
    $region29: #{network_forward.1} parent=1 // pred_fallthru
      _
    // Predicated region
    $region30: #{network_forward.1} parent=1 // pred_check
      _
    $region31: #{network_forward.1} parent=1 // pred_check_branch
      %72 = sbr.rel (0) target = $region33
    $region32: #{network_forward.1} parent=1 // pred_region
      %74 = dma.done [#allocation3], 128
    $region33: #{network_forward.1} parent=1 // pred_fallthru
      _
    // Predicated region
    $region34: #{network_forward.1} parent=1 // pred_check
      _
    $region35: #{network_forward.1} parent=1 // pred_check_branch
      %76 = sbr.rel (0) target = $region37
    $region36: #{network_forward.1} parent=1 // pred_region
      %78 = dma.done [#allocation5], 192
    $region37: #{network_forward.1} parent=1 // pred_fallthru
      _
    // Predicated region
    $region38: #{network_forward.1} parent=1 // pred_check
      _
    $region39: #{network_forward.1} parent=1 // pred_check_branch
      %80 = sbr.rel (0) target = $region41
    $region40: #{network_forward.1} parent=1 // pred_region
      %82 = dma.done [#allocation5], 2048
    $region41: #{network_forward.1} parent=1 // pred_fallthru
      _
    // Predicated region
    $region42: #{network_forward.1} parent=1 // pred_check
      _
    $region43: #{network_forward.1} parent=1 // pred_check_branch
      %84 = sbr.rel (0) target = $region45
    $region44: #{network_forward.1} parent=1 // pred_region
      %86 = dma.done [#allocation8], 2048
    $region45: #{network_forward.1} parent=1 // pred_fallthru
      _
    %v88 = vld [vmem:[#allocation2] sm:$0xff]
    %v89 = vpack.c.bf16 %v88, %v88
    %v90 = vld [vmem:[#allocation4] sm:$0xf]
    %v91 = vld [vmem:[#allocation4 + $0x4] sm:$0xf]
    %v92 = vld [vmem:[#allocation4 + $0x8] sm:$0x7]
    %v93 = vld [vmem:[%s2] sm:$0x1]
    %v95 = vperm.slane %v93, 0
    %v100 = vunpack.c.l.b16 %v90
    %v101 = vunpack.c.l.b16 %v91
    %v102 = vunpack.c.l.b16 %v92
    %v103 = vpack.c.b16 %v101, %v100
    %v104 = vpack.c.b16 %v102, %v102
    %vm106 = vcmask 179200
    %v108 = vsel %vm106, %v89, 0
    %vm110 = vcmask 1042432
    %v112 = vsel %vm110, %v104, 0
    %114 = vmatpush.bf16.msra.mxu0 0
    %115 = vmatpush.bf16.msra.mxu0 0
    %116 = vmatpush.bf16.msra.mxu0 0
    %117 = vmatpush.bf16.msra.mxu0 0
    %118 = vmatpush.bf16.msra.mxu0 0
    %119 = vmatpush.bf16.msra.mxu0 0
    %120 = vmatpush.bf16.msra.mxu0 %v112
    %121 = vmatpush.bf16.msra.mxu0 %v103
    %122 = vmatmul.bf16.gmra.mxu0 %v108
    %v123 = vpop.f32.mrf.mxu0
    %v124 = vadd.f32 %v95, %v123
    %v125 = vpop.f32.mrf.mxu0
    %126 = vdwg.mxu0
    %v127 = vmax.f32 %v124, 0.0
    %v128 = vpack.c.bf16 %v127, %v127
    %v129 = vld [vmem:[#allocation6] sm:$0xff]
    %v130 = vld [vmem:[#allocation6 + $0x8] sm:$0xff]
    %v131 = vld [vmem:[#allocation6 + $0x10] sm:$0xff]
    %v132 = vld [vmem:[#allocation6 + $0x18] sm:$0xff]
    %v133 = vld [vmem:[#allocation6 + $0x20] sm:$0xff]
    %v134 = vld [vmem:[#allocation6 + $0x28] sm:$0xff]
    %v135 = vld [vmem:[#allocation6 + $0x30] sm:$0xff]
    %v136 = vld [vmem:[#allocation6 + $0x38] sm:$0xff]
    %v137 = vld [vmem:[#allocation6 + $0x40] sm:$0xff]
    %v138 = vld [vmem:[#allocation6 + $0x48] sm:$0xff]
    %v139 = vld [vmem:[#allocation6 + $0x50] sm:$0xff]
    %v140 = vld [vmem:[#allocation6 + $0x58] sm:$0xff]
    %v141 = vld [vmem:[#allocation6 + $0x60] sm:$0xff]
    %v142 = vld [vmem:[#allocation6 + $0x68] sm:$0xff]
    %v143 = vld [vmem:[#allocation6 + $0x70] sm:$0xff]
    %v144 = vld [vmem:[#allocation6 + $0x78] sm:$0xff]
    %v145 = vld [vmem:[%s4] sm:$0x3]
    %v147 = vperm.slane %v145, 0
    %v148 = vperm.slane %v145, 1
    %v167 = vunpack.c.l.b16 %v129
    %v168 = vunpack.c.h.b16 %v129
    %v169 = vunpack.c.l.b16 %v130
    %v170 = vunpack.c.h.b16 %v130
    %v171 = vunpack.c.l.b16 %v131
    %v172 = vunpack.c.h.b16 %v131
    %v173 = vunpack.c.l.b16 %v132
    %v174 = vunpack.c.h.b16 %v132
    %v175 = vunpack.c.l.b16 %v133
    %v176 = vunpack.c.h.b16 %v133
    %v177 = vunpack.c.l.b16 %v134
    %v178 = vunpack.c.h.b16 %v134
    %v179 = vunpack.c.l.b16 %v135
    %v180 = vunpack.c.h.b16 %v135
    %v181 = vunpack.c.l.b16 %v136
    %v182 = vunpack.c.h.b16 %v136
    %v183 = vunpack.c.l.b16 %v137
    %v184 = vunpack.c.h.b16 %v137
    %v185 = vunpack.c.l.b16 %v138
    %v186 = vunpack.c.h.b16 %v138
    %v187 = vunpack.c.l.b16 %v139
    %v188 = vunpack.c.h.b16 %v139
    %v189 = vunpack.c.l.b16 %v140
    %v190 = vunpack.c.h.b16 %v140
    %v191 = vunpack.c.l.b16 %v141
    %v192 = vunpack.c.h.b16 %v141
    %v193 = vunpack.c.l.b16 %v142
    %v194 = vunpack.c.h.b16 %v142
    %v195 = vunpack.c.l.b16 %v143
    %v196 = vunpack.c.h.b16 %v143
    %v197 = vunpack.c.l.b16 %v144
    %v198 = vunpack.c.h.b16 %v144
    %v199 = vpack.c.b16 %v169, %v167
    %v200 = vpack.c.b16 %v170, %v168
    %v201 = vpack.c.b16 %v173, %v171
    %v202 = vpack.c.b16 %v174, %v172
    %v203 = vpack.c.b16 %v177, %v175
    %v204 = vpack.c.b16 %v178, %v176
    %v205 = vpack.c.b16 %v181, %v179
    %v206 = vpack.c.b16 %v182, %v180
    %v207 = vpack.c.b16 %v185, %v183
    %v208 = vpack.c.b16 %v186, %v184
    %v209 = vpack.c.b16 %v189, %v187
    %v210 = vpack.c.b16 %v190, %v188
    %v211 = vpack.c.b16 %v193, %v191
    %v212 = vpack.c.b16 %v194, %v192
    %v213 = vpack.c.b16 %v197, %v195
    %v214 = vpack.c.b16 %v198, %v196
    %231 = vmatpush.bf16.msra.mxu0 %v213
    %232 = vmatpush.bf16.msra.mxu0 %v211
    %233 = vmatpush.bf16.msra.mxu0 %v209
    %234 = vmatpush.bf16.msra.mxu0 %v207
    %235 = vmatpush.bf16.msra.mxu0 %v205
    %236 = vmatpush.bf16.msra.mxu0 %v203
    %237 = vmatpush.bf16.msra.mxu0 %v201
    %238 = vmatpush.bf16.msra.mxu0 %v199
    %239 = vmatmul.bf16.gmra.mxu0 %v128
    %v240 = vpop.f32.mrf.mxu0
    %v241 = vadd.f32 %v147, %v240
    %v242 = vpop.f32.mrf.mxu0
    %243 = vdwg.mxu0
    %244 = vmatpush.bf16.msra.mxu0 %v214
    %245 = vmatpush.bf16.msra.mxu0 %v212
    %246 = vmatpush.bf16.msra.mxu0 %v210
    %247 = vmatpush.bf16.msra.mxu0 %v208
    %248 = vmatpush.bf16.msra.mxu0 %v206
    %249 = vmatpush.bf16.msra.mxu0 %v204
    %250 = vmatpush.bf16.msra.mxu0 %v202
    %251 = vmatpush.bf16.msra.mxu0 %v200
    %252 = vmatmul.bf16.gmra.mxu0 %v128
    %v253 = vpop.f32.mrf.mxu0
    %v254 = vadd.f32 %v148, %v253
    %v255 = vpop.f32.mrf.mxu0
    %256 = vdwg.mxu0
    %v257 = vmax.f32 %v241, 0.0
    %v258 = vmax.f32 %v254, 0.0
    %v259 = vpack.c.bf16 %v257, %v257
    %v260 = vpack.c.bf16 %v258, %v258
    %v261 = vld [vmem:[#allocation7] sm:$0xf]
    %v262 = vld [vmem:[#allocation7 + $0x4] sm:$0xf]
    %v263 = vld [vmem:[#allocation7 + $0x8] sm:$0xf]
    %v264 = vld [vmem:[#allocation7 + $0xc] sm:$0xf]
    %v265 = vld [vmem:[#allocation7 + $0x10] sm:$0xf]
    %v266 = vld [vmem:[#allocation7 + $0x14] sm:$0xf]
    %v267 = vld [vmem:[#allocation7 + $0x18] sm:$0xf]
    %v268 = vld [vmem:[#allocation7 + $0x1c] sm:$0xf]
    %v269 = vld [vmem:[#allocation7 + $0x20] sm:$0xf]
    %v270 = vld [vmem:[#allocation7 + $0x24] sm:$0xf]
    %v271 = vld [vmem:[#allocation7 + $0x28] sm:$0xf]
    %v272 = vld [vmem:[#allocation7 + $0x2c] sm:$0xf]
    %v273 = vld [vmem:[#allocation7 + $0x30] sm:$0xf]
    %v274 = vld [vmem:[#allocation7 + $0x34] sm:$0xf]
    %v275 = vld [vmem:[#allocation7 + $0x38] sm:$0xf]
    %v276 = vld [vmem:[#allocation7 + $0x3c] sm:$0xf]
    %v277 = vld [vmem:[#allocation7 + $0x40] sm:$0xf]
    %v278 = vld [vmem:[#allocation7 + $0x44] sm:$0xf]
    %v279 = vld [vmem:[#allocation7 + $0x48] sm:$0xf]
    %v280 = vld [vmem:[#allocation7 + $0x4c] sm:$0xf]
    %v281 = vld [vmem:[#allocation7 + $0x50] sm:$0xf]
    %v282 = vld [vmem:[#allocation7 + $0x54] sm:$0xf]
    %v283 = vld [vmem:[#allocation7 + $0x58] sm:$0xf]
    %v284 = vld [vmem:[#allocation7 + $0x5c] sm:$0xf]
    %v285 = vld [vmem:[#allocation7 + $0x60] sm:$0xf]
    %v286 = vld [vmem:[#allocation7 + $0x64] sm:$0xf]
    %v287 = vld [vmem:[#allocation7 + $0x68] sm:$0xf]
    %v288 = vld [vmem:[#allocation7 + $0x6c] sm:$0xf]
    %v289 = vld [vmem:[#allocation7 + $0x70] sm:$0xf]
    %v290 = vld [vmem:[#allocation7 + $0x74] sm:$0xf]
    %v291 = vld [vmem:[#allocation7 + $0x78] sm:$0xf]
    %v292 = vld [vmem:[#allocation7 + $0x7c] sm:$0xf]
    %v293 = vld [vmem:[%s6] sm:$0x1]
    %v295 = vperm.slane %v293, 0
    %v329 = vunpack.c.l.b16 %v261
    %v330 = vunpack.c.l.b16 %v262
    %v331 = vunpack.c.l.b16 %v263
    %v332 = vunpack.c.l.b16 %v264
    %v333 = vunpack.c.l.b16 %v265
    %v334 = vunpack.c.l.b16 %v266
    %v335 = vunpack.c.l.b16 %v267
    %v336 = vunpack.c.l.b16 %v268
    %v337 = vunpack.c.l.b16 %v269
    %v338 = vunpack.c.l.b16 %v270
    %v339 = vunpack.c.l.b16 %v271
    %v340 = vunpack.c.l.b16 %v272
    %v341 = vunpack.c.l.b16 %v273
    %v342 = vunpack.c.l.b16 %v274
    %v343 = vunpack.c.l.b16 %v275
    %v344 = vunpack.c.l.b16 %v276
    %v345 = vunpack.c.l.b16 %v277
    %v346 = vunpack.c.l.b16 %v278
    %v347 = vunpack.c.l.b16 %v279
    %v348 = vunpack.c.l.b16 %v280
    %v349 = vunpack.c.l.b16 %v281
    %v350 = vunpack.c.l.b16 %v282
    %v351 = vunpack.c.l.b16 %v283
    %v352 = vunpack.c.l.b16 %v284
    %v353 = vunpack.c.l.b16 %v285
    %v354 = vunpack.c.l.b16 %v286
    %v355 = vunpack.c.l.b16 %v287
    %v356 = vunpack.c.l.b16 %v288
    %v357 = vunpack.c.l.b16 %v289
    %v358 = vunpack.c.l.b16 %v290
    %v359 = vunpack.c.l.b16 %v291
    %v360 = vunpack.c.l.b16 %v292
    %v361 = vpack.c.b16 %v330, %v329
    %v362 = vpack.c.b16 %v332, %v331
    %v363 = vpack.c.b16 %v334, %v333
    %v364 = vpack.c.b16 %v336, %v335
    %v365 = vpack.c.b16 %v338, %v337
    %v366 = vpack.c.b16 %v340, %v339
    %v367 = vpack.c.b16 %v342, %v341
    %v368 = vpack.c.b16 %v344, %v343
    %v369 = vpack.c.b16 %v346, %v345
    %v370 = vpack.c.b16 %v348, %v347
    %v371 = vpack.c.b16 %v350, %v349
    %v372 = vpack.c.b16 %v352, %v351
    %v373 = vpack.c.b16 %v354, %v353
    %v374 = vpack.c.b16 %v356, %v355
    %v375 = vpack.c.b16 %v358, %v357
    %v376 = vpack.c.b16 %v360, %v359
    %393 = vmatpush.bf16.msra.mxu0 %v368
    %394 = vmatpush.bf16.msra.mxu0 %v367
    %395 = vmatpush.bf16.msra.mxu0 %v366
    %396 = vmatpush.bf16.msra.mxu0 %v365
    %397 = vmatpush.bf16.msra.mxu0 %v364
    %398 = vmatpush.bf16.msra.mxu0 %v363
    %399 = vmatpush.bf16.msra.mxu0 %v362
    %400 = vmatpush.bf16.msra.mxu0 %v361
    %401 = vmatmul.bf16.gmra.mxu0 %v259
    %v402 = vpop.f32.mrf.mxu0
    %v403 = vadd.f32 %v295, %v402
    %v404 = vpop.f32.mrf.mxu0
    %405 = vdwg.mxu0
    %406 = vmatpush.bf16.msra.mxu0 %v376
    %407 = vmatpush.bf16.msra.mxu0 %v375
    %408 = vmatpush.bf16.msra.mxu0 %v374
    %409 = vmatpush.bf16.msra.mxu0 %v373
    %410 = vmatpush.bf16.msra.mxu0 %v372
    %411 = vmatpush.bf16.msra.mxu0 %v371
    %412 = vmatpush.bf16.msra.mxu0 %v370
    %413 = vmatpush.bf16.msra.mxu0 %v369
    %414 = vmatmul.bf16.gmra.mxu0 %v260
    %v415 = vpop.f32.mrf.mxu0
    %v416 = vadd.f32 %v403, %v415
    %v417 = vpop.f32.mrf.mxu0
    %418 = vdwg.mxu0
    %v419 = vpack.c.bf16 %v416, %v416
    %420 = vst [vmem:[%s7] sm:$0xf] %v419
    // Predicated region
    $region46: #{network_forward.1} parent=1 // pred_check
      _
    $region47: #{network_forward.1} parent=1 // pred_check_branch
      %422 = sbr.rel (0) target = $region49
    $region48: #{network_forward.1} parent=1 // pred_region
      _
    $region49: #{network_forward.1} parent=1 // pred_fallthru
      _
    // Predicated region
    $region50: #{network_forward.1} parent=1 // pred_check
      _
    $region51: #{network_forward.1} parent=1 // pred_check_branch
      %424 = sbr.rel (0) target = $region53
    $region52: #{network_forward.1} parent=1 // pred_region
      _
    $region53: #{network_forward.1} parent=1 // pred_fallthru
      _
    %425 = vsyncpa [#allocation3], 1
    %426 = vsyncpa [#allocation5], 1
    %427 = vsyncpa [#allocation8], 1

</llo_original>
